<compile_context>
chip_gen: v7x
topology: tpu7x:2x2x1
jax: 0.10.0
libtpu: 0.0.40
codegen_flags: <defaults>
</compile_context>

<pallas_src>
import functools
import math

import jax
import jax.numpy as jnp
from jax import lax
from jax.experimental import pallas as pl
from jax.experimental.pallas import tpu as pltpu


NEG_INF = -1e30  # large finite negative: safer than -inf under masking


# ----------------------------------------------------------------------------
# Fused attention-head kernel (one batch-block per grid step).
#   x_ref : (Bblk, T, C)    input slab
#   w_ref : (C, 3*Hp)       fused, lane-padded projection weights [Wk|Wq|Wv]
#   o_ref : (Bblk, T, H)    output slab
# ----------------------------------------------------------------------------
def _head_kernel(x_ref, w_ref, o_ref, *, scale, head_size, hp):
    Bblk, T, C = x_ref.shape

    # ---- fused K/Q/V projection: one (Bblk*T, C) @ (C, 3*Hp) MXU matmul ----
    x2d = x_ref[...].reshape(Bblk * T, C)
    kqv = jnp.dot(x2d.astype(jnp.bfloat16), w_ref[...].astype(jnp.bfloat16),
                  preferred_element_type=jnp.float32)            # (Bblk*T, 3Hp)
    kqv = kqv.reshape(Bblk, T, 3 * hp)
    k = kqv[:, :, 0 * hp:1 * hp]                                 # lane-aligned
    q = kqv[:, :, 1 * hp:2 * hp] * scale                         # scale on (T,Hp)
    v = kqv[:, :, 2 * hp:3 * hp]

    # ---- causal scores: contract the head axis directly (no explicit k.T) --
    s = jnp.einsum('bqh,bkh->bqk',
                   q.astype(jnp.bfloat16), k.astype(jnp.bfloat16),
                   preferred_element_type=jnp.float32)           # (Bblk, T, T)
    row = lax.broadcasted_iota(jnp.int32, (Bblk, T, T), 1)
    col = lax.broadcasted_iota(jnp.int32, (Bblk, T, T), 2)
    s = jnp.where(col <= row, s, NEG_INF)

    # ---- numerically-stable softmax (f32), normalization deferred ----------
    m = jnp.max(s, axis=-1, keepdims=True)
    e = jnp.exp(s - m)
    l = jnp.sum(e, axis=-1, keepdims=True)                       # (Bblk, T, 1)

    # ---- context matmul, then divide the (T, Hp) accumulator ---------------
    ctx = jnp.einsum('bqk,bkh->bqh',
                     e.astype(jnp.bfloat16), v.astype(jnp.bfloat16),
                     preferred_element_type=jnp.float32)         # (Bblk, T, Hp)
    out = ctx * pl.reciprocal(l, approx=True)

    # Dropout(wei) is identity in eval mode.
    o_ref[...] = out[:, :, :head_size].astype(o_ref.dtype)


def _largest_batch_block(B, T, target_m=256):
    """Largest divisor of B whose folded matmul M = blk*T stays <= target_m."""
    best = 1
    for d in range(1, B + 1):
        if B % d == 0 and d * T <= target_m:
            best = d
    return best


def head_forward(x, wk, wq, wv, *, block_b=None):
    """Single-head causal self-attention (matches the PyTorch `Head.forward`).

    x          : (B, T, C)
    wk, wq, wv : (H, C)  -- PyTorch nn.Linear(C, H, bias=False) weight layout
    returns    : (B, T, H)
    """
    B, T, C = x.shape
    H = wk.shape[0]
    Hp = ((H + 127) // 128) * 128            # lane-aligned projection width

    # Fused, lane-padded projection weight (C, 3*Hp) = [Wk.T|0, Wq.T|0, Wv.T|0].
    # (In a real model this layout would be precomputed once, not per call.)
    def _pad(w):
        return jnp.pad(w.T, ((0, 0), (0, Hp - H)))
    w_fused = jnp.concatenate([_pad(wk), _pad(wq), _pad(wv)], axis=-1)

    if block_b is None:
        block_b = _largest_batch_block(B, T)
    assert B % block_b == 0, (B, block_b)

    kernel = functools.partial(
        _head_kernel, scale=float(C) ** -0.5, head_size=H, hp=Hp)

    return pl.pallas_call(
        kernel,
        out_shape=jax.ShapeDtypeStruct((B, T, H), x.dtype),
        grid=(B // block_b,),
        in_specs=[
            pl.BlockSpec((block_b, T, C), lambda b: (b, 0, 0)),
            pl.BlockSpec((C, 3 * Hp), lambda b: (0, 0)),
        ],
        out_specs=pl.BlockSpec((block_b, T, H), lambda b: (b, 0, 0)),
        compiler_params=pltpu.CompilerParams(
            dimension_semantics=("parallel",)),
    )(x, w_fused)


# ----------------------------------------------------------------------------
# Pure-JAX f32 reference (mirrors the PyTorch forward exactly).
# ----------------------------------------------------------------------------
def head_reference(x, wk, wq, wv):
    B, T, C = x.shape
    k = x @ wk.T
    q = x @ wq.T
    wei = (q @ jnp.swapaxes(k, -2, -1)) * C ** (-0.5)
    tril = jnp.tril(jnp.ones((T, T), jnp.float32))
    wei = jnp.where(tril == 0, -jnp.inf, wei)
    wei = jax.nn.softmax(wei, axis=-1)
    v = x @ wv.T
    return wei @ v


if __name__ == "__main__":
    # Small shapes implied by the module: batch=2, seq(T)=8 (<= block_size),
    # n_embd=32, head_size=16.
    B, T, C, H = 2, 8, 32, 16

    key = jax.random.PRNGKey(0)
    kx, kk, kq, kv = jax.random.split(key, 4)
    x = jax.random.normal(kx, (B, T, C), jnp.float32)

    # PyTorch nn.Linear(C, H, bias=False) weights are (H, C); uniform fan-in init.
    s = 1.0 / math.sqrt(C)
    wk = jax.random.uniform(kk, (H, C), jnp.float32, -s, s)
    wq = jax.random.uniform(kq, (H, C), jnp.float32, -s, s)
    wv = jax.random.uniform(kv, (H, C), jnp.float32, -s, s)

    out = head_forward(x, wk, wq, wv)
    out = jax.block_until_ready(out)

    ref = head_reference(x, wk, wq, wv)
    assert out.shape == (B, T, H), out.shape
    assert bool(jnp.all(jnp.isfinite(out)))
    # bf16 MXU operands + approx reciprocal -> loosened tolerance vs f32 ref.
    assert bool(jnp.allclose(out, ref, rtol=3e-2, atol=3e-2)), (
        float(jnp.max(jnp.abs(out - ref))))
    print("KERNEL_OK")
</pallas_src>

<mosaic_0001>
module attributes {stable_mosaic.version = 11 : i64} {
  func.func @_head_kernel(%arg0: i32, %arg1: memref<2x8x32xf32, #tpu.memory_space<vmem>>, %arg2: memref<32x384xf32, #tpu.memory_space<vmem>>, %arg3: memref<2x8x16xf32, #tpu.memory_space<vmem>>) attributes {dimension_semantics = [#tpu.dimension_semantics<parallel>], iteration_bounds = array<i64: 1>, scalar_prefetch = 0 : i64, scratch_operands = 0 : i64, tpu.core_type = #tpu.core_type<tc>, window_params = [{transform_indices = @transform_0, window_bounds = array<i64: 2, 8, 32>}, {pipeline_mode = #tpu.pipeline_mode<synchronous>, transform_indices = @transform_1, window_bounds = array<i64: 32, 384>}, {transform_indices = @transform_2, window_bounds = array<i64: 2, 8, 16>}]} {
    %c0 = arith.constant 0 : index
    %c0_0 = arith.constant 0 : index
    %c0_1 = arith.constant 0 : index
    %0 = vector.load %arg1[%c0, %c0_0, %c0_1] : memref<2x8x32xf32, #tpu.memory_space<vmem>>, vector<2x8x32xf32>
    %1 = vector.shape_cast %0 : vector<2x8x32xf32> to vector<16x32xf32>
    %2 = arith.truncf %1 : vector<16x32xf32> to vector<16x32xbf16>
    %c0_2 = arith.constant 0 : index
    %c0_3 = arith.constant 0 : index
    %3 = vector.load %arg2[%c0_2, %c0_3] : memref<32x384xf32, #tpu.memory_space<vmem>>, vector<32x384xf32>
    %4 = arith.truncf %3 : vector<32x384xf32> to vector<32x384xbf16>
    %cst = arith.constant dense<0.000000e+00> : vector<16x384xf32>
    %5 = tpu.matmul %2, %4, %cst {dimension_numbers = #tpu.dot_dimension_numbers<[1], [0], [0], [1], [0, 0, 1, 1], [], []>} : vector<16x32xbf16>, vector<32x384xbf16>, vector<16x384xf32> -> vector<16x384xf32>
    %6 = vector.shape_cast %5 : vector<16x384xf32> to vector<2x8x384xf32>
    %7 = vector.extract_strided_slice %6 {offsets = [0, 0, 0], sizes = [2, 8, 128], strides = [1, 1, 1]} : vector<2x8x384xf32> to vector<2x8x128xf32>
    %8 = vector.extract_strided_slice %6 {offsets = [0, 0, 128], sizes = [2, 8, 128], strides = [1, 1, 1]} : vector<2x8x384xf32> to vector<2x8x128xf32>
    %cst_4 = arith.constant 0.176776692 : f32
    %9 = vector.broadcast %cst_4 : f32 to vector<2x8x128xf32>
    %10 = arith.mulf %8, %9 : vector<2x8x128xf32>
    %11 = vector.extract_strided_slice %6 {offsets = [0, 0, 256], sizes = [2, 8, 128], strides = [1, 1, 1]} : vector<2x8x384xf32> to vector<2x8x128xf32>
    %12 = arith.truncf %10 : vector<2x8x128xf32> to vector<2x8x128xbf16>
    %13 = arith.truncf %7 : vector<2x8x128xf32> to vector<2x8x128xbf16>
    "tpu.trace_start"() <{level = 10 : i32, message = "bqh,bkh->bqk"}> : () -> ()
    %cst_5 = arith.constant dense<0.000000e+00> : vector<2x8x8xf32>
    %14 = tpu.matmul %12, %13, %cst_5 {dimension_numbers = #tpu.dot_dimension_numbers<[2], [2], [1], [1], [0, 0, 0, 1, 1, 1], [0], [0]>} : vector<2x8x128xbf16>, vector<2x8x128xbf16>, vector<2x8x8xf32> -> vector<2x8x8xf32>
    "tpu.trace_stop"() : () -> ()
    %15 = tpu.iota {dimensions = array<i32: 1>} : vector<2x8x8xi32>
    %16 = tpu.iota {dimensions = array<i32: 2>} : vector<2x8x8xi32>
    %17 = arith.cmpi sle, %16, %15 : vector<2x8x8xi32>
    %cst_6 = arith.constant -1.000000e+30 : f32
    %18 = vector.broadcast %cst_6 : f32 to vector<2x8x8xf32>
    %19 = arith.select %17, %14, %18 : vector<2x8x8xi1>, vector<2x8x8xf32>
    %cst_7 = arith.constant dense<0xFF800000> : vector<2x8xf32>
    %20 = vector.multi_reduction <maximumf>, %19, %cst_7 [2] : vector<2x8x8xf32> to vector<2x8xf32>
    %21 = vector.shape_cast %20 : vector<2x8xf32> to vector<2x8x1xf32>
    %22 = vector.broadcast %21 : vector<2x8x1xf32> to vector<2x8x8xf32>
    %23 = arith.subf %19, %22 : vector<2x8x8xf32>
    %24 = math.exp %23 : vector<2x8x8xf32>
    %cst_8 = arith.constant dense<0.000000e+00> : vector<2x8xf32>
    %25 = vector.multi_reduction <add>, %24, %cst_8 [2] : vector<2x8x8xf32> to vector<2x8xf32>
    %26 = vector.shape_cast %25 : vector<2x8xf32> to vector<2x8x1xf32>
    %27 = arith.truncf %24 : vector<2x8x8xf32> to vector<2x8x8xbf16>
    %28 = arith.truncf %11 : vector<2x8x128xf32> to vector<2x8x128xbf16>
    "tpu.trace_start"() <{level = 10 : i32, message = "bqk,bkh->bqh"}> : () -> ()
    %cst_9 = arith.constant dense<0.000000e+00> : vector<2x8x128xf32>
    %29 = tpu.matmul %27, %28, %cst_9 {dimension_numbers = #tpu.dot_dimension_numbers<[2], [1], [1], [2], [0, 0, 0, 1, 1, 2], [0], [0]>} : vector<2x8x8xbf16>, vector<2x8x128xbf16>, vector<2x8x128xf32> -> vector<2x8x128xf32>
    "tpu.trace_stop"() : () -> ()
    %30 = tpu.reciprocal %26 {approx = true} : vector<2x8x1xf32> -> vector<2x8x1xf32>
    %31 = vector.broadcast %30 : vector<2x8x1xf32> to vector<2x8x128xf32>
    %32 = arith.mulf %29, %31 : vector<2x8x128xf32>
    %33 = vector.extract_strided_slice %32 {offsets = [0, 0, 0], sizes = [2, 8, 16], strides = [1, 1, 1]} : vector<2x8x128xf32> to vector<2x8x16xf32>
    %c0_10 = arith.constant 0 : index
    %c0_11 = arith.constant 0 : index
    %c0_12 = arith.constant 0 : index
    %34 = vector.load %arg3[%c0_10, %c0_11, %c0_12] : memref<2x8x16xf32, #tpu.memory_space<vmem>>, vector<2x8x16xf32>
    tpu.vector_store %arg3[%c0_10, %c0_11, %c0_12], %33 {strides = array<i32>} : memref<2x8x16xf32, #tpu.memory_space<vmem>>, vector<2x8x16xf32>,
    return
  }
  func.func @transform_0(%arg0: i32) -> (i32, i32, i32) {
    %c0_i32 = arith.constant 0 : i32
    %c0_i32_0 = arith.constant 0 : i32
    %c0_i32_1 = arith.constant 0 : i32
    return %arg0, %c0_i32, %c0_i32_0 : i32, i32, i32
  }
  func.func @transform_1(%arg0: i32) -> (i32, i32) {
    %c0_i32 = arith.constant 0 : i32
    %c0_i32_0 = arith.constant 0 : i32
    %c0_i32_1 = arith.constant 0 : i32
    return %c0_i32, %c0_i32_0 : i32, i32
  }
  func.func @transform_2(%arg0: i32) -> (i32, i32, i32) {
    %c0_i32 = arith.constant 0 : i32
    %c0_i32_0 = arith.constant 0 : i32
    %c0_i32_1 = arith.constant 0 : i32
    return %arg0, %c0_i32, %c0_i32_0 : i32, i32, i32
  }
}

</mosaic_0001>

<llo_original>
// kernel: tpu_custom_call.1
$region0: #{tpu_custom_call.1}
  #allocation0 [shape = 'u32[]', space=smem, size = 0x4, offset = 0x4, fixed_abs, tag = 'smem constant byte address 0x4 - core index']
  #allocation1 [shape = 'u32[144,128]{1,0:T(1,128)}', space=vmem, size = 0x12000, scoped, tag = 'internal scratch']
  %s0 = inlined_call_operand.hbm [shape: f32[2,8,32], index: 0, kind: input, shape index: {}]
  %s1 = inlined_call_operand.hbm [shape: f32[32,384], index: 1, kind: input, shape index: {}]
  %s2 = inlined_call_operand.hbm [shape: f32[2,8,16], index: 2, kind: output, shape index: {}]
  %s3 = sld [smem:[#allocation0]]
  $region26: #{tpu_custom_call.1} parent=0
    _
  %s5 = ssub.s32 1, %s3
  %s6 = scalar_select 0, %s5, %s3
  $region1: #{tpu_custom_call.1} parent=0
    #allocation2 [shape = 'u8[8192]{0}', space=vmem, size = 0x2000, scoped, tag = 'input window, operand 0, single buffered']
    #allocation3 [shape = 's32[1]{0}', space=sflag, size = 0x4, scoped, tag = 'scoped memory for tpu_custom_call.1']
    #allocation4 [shape = 's32[1]{0}', space=sflag, size = 0x4, scoped, tag = 'scoped memory for tpu_custom_call.1']
    #allocation5 [shape = 'u8[49152]{0}', space=vmem, size = 0xc000, scoped, tag = 'input window, operand 1, single buffered']
    #allocation6 [shape = 's32[1]{0}', space=sflag, size = 0x4, scoped, tag = 'scoped memory for tpu_custom_call.1']
    #allocation7 [shape = 'u8[8192]{0}', space=vmem, size = 0x2000, scoped, tag = 'output window, operand 0, single buffered']
    %7 = vsyncpa [#allocation3], 0
    %8 = vsyncpa [#allocation6], 0
    %9 = vsyncpa [#allocation4], 0
    // Predicated region
    $region2: #{tpu_custom_call.1} parent=1 // pred_check
      _
    $region3: #{tpu_custom_call.1} parent=1 // pred_check_branch
      %11 = sbr.rel (0) target = $region5
    $region4: #{tpu_custom_call.1} parent=1 // pred_region
      %s13 = ssub.s32 256, 256
      %14 = vsyncadd [#allocation3], %s13
      %s15 = sshll.u32 [#allocation2], 4
      %s16 = int_to_ptr.vmem [resolvable:$true] %s15
      %21 = dma.hbm_to_vmem [thread:$0]  %s0, 256, %s16, [#allocation3], 128, 128, 8
    $region5: #{tpu_custom_call.1} parent=1 // pred_fallthru
      _
    // Predicated region
    $region6: #{tpu_custom_call.1} parent=1 // pred_check
      _
    $region7: #{tpu_custom_call.1} parent=1 // pred_check_branch
      %23 = sbr.rel (0) target = $region9
    $region8: #{tpu_custom_call.1} parent=1 // pred_region
      %s25 = ssub.s32 1536, 1536
      %26 = vsyncadd [#allocation6], %s25
      %s27 = sshll.u32 [#allocation5], 4
      %s28 = int_to_ptr.vmem [resolvable:$true] %s27
      %33 = dma.hbm_to_vmem [thread:$0]  %s1, 1536, %s28, [#allocation6], 384, 384, 24
    $region9: #{tpu_custom_call.1} parent=1 // pred_fallthru
      _
    // Predicated region
    $region10: #{tpu_custom_call.1} parent=1 // pred_check
      _
    $region11: #{tpu_custom_call.1} parent=1 // pred_check_branch
      %35 = sbr.rel (0) target = $region13
    $region12: #{tpu_custom_call.1} parent=1 // pred_region
      %36 = dma.done [#allocation3], 256
    $region13: #{tpu_custom_call.1} parent=1 // pred_fallthru
      _
    // Predicated region
    $region14: #{tpu_custom_call.1} parent=1 // pred_check
      _
    $region15: #{tpu_custom_call.1} parent=1 // pred_check_branch
      %38 = sbr.rel (0) target = $region17
    $region16: #{tpu_custom_call.1} parent=1 // pred_region
      %39 = dma.done [#allocation6], 1536
    $region17: #{tpu_custom_call.1} parent=1 // pred_fallthru
      _
    %v41 = vld [vmem:[#allocation2] sm:$0xff]
    %v42 = vld [vmem:[#allocation2 + $0x8] sm:$0xff]
    %v43 = vpack.c.bf16 %v42, %v41
    %v44 = vld [vmem:[#allocation5] sm:$0xff]
    %v45 = vld [vmem:[#allocation5 + $0x8] sm:$0xff]
    %v46 = vld [vmem:[#allocation5 + $0x10] sm:$0xff]
    %v47 = vld [vmem:[#allocation5 + $0x18] sm:$0xff]
    %v48 = vld [vmem:[#allocation5 + $0x20] sm:$0xff]
    %v49 = vld [vmem:[#allocation5 + $0x28] sm:$0xff]
    %v50 = vld [vmem:[#allocation5 + $0x30] sm:$0xff]
    %v51 = vld [vmem:[#allocation5 + $0x38] sm:$0xff]
    %v52 = vld [vmem:[#allocation5 + $0x40] sm:$0xff]
    %v53 = vld [vmem:[#allocation5 + $0x48] sm:$0xff]
    %v54 = vld [vmem:[#allocation5 + $0x50] sm:$0xff]
    %v55 = vld [vmem:[#allocation5 + $0x58] sm:$0xff]
    %v56 = vpack.c.bf16 %v47, %v44
    %v57 = vpack.c.bf16 %v48, %v45
    %v58 = vpack.c.bf16 %v49, %v46
    %v59 = vpack.c.bf16 %v53, %v50
    %v60 = vpack.c.bf16 %v54, %v51
    %v61 = vpack.c.bf16 %v55, %v52
    %vm62 = vcmask 261120
    %v64 = vsel %vm62, %v43, 0
    %66 = vmatprep.subr.bf16.mxu0 %v57
    %67 = vmatpush1.bf16.msra.mxu0 %v56
    %68 = vmatprep.subr.bf16.mxu0 %v60
    %69 = vmatpush1.bf16.msra.mxu0 %v59
    %70 = vmatprep.subr.bf16.mxu0 0
    %71 = vmatpush1.bf16.msra.mxu0 0
    %72 = vmatprep.subr.bf16.mxu0 0
    %73 = vmatpush1.bf16.msra.mxu0 0
    %74 = vmatprep.subr.bf16.mxu0 0
    %75 = vmatpush1.bf16.msra.mxu0 0
    %76 = vmatprep.subr.bf16.mxu0 0
    %77 = vmatpush1.bf16.msra.mxu0 0
    %78 = vmatprep.subr.bf16.mxu0 0
    %79 = vmatpush1.bf16.msra.mxu0 0
    %80 = vmatprep.subr.bf16.mxu0 0
    %81 = vmatpush1.bf16.msra.mxu0 0
    %82 = vmatprep.subr.bf16.mxu0 0
    %83 = vmatpush1.bf16.msra.mxu0 0
    %84 = vmatprep.subr.bf16.mxu0 0
    %85 = vmatpush1.bf16.msra.mxu0 0
    %86 = vmatprep.subr.bf16.mxu0 0
    %87 = vmatpush1.bf16.msra.mxu0 0
    %88 = vmatprep.subr.bf16.mxu0 0
    %89 = vmatpush1.bf16.msra.mxu0 0
    %90 = vmatprep.subr.bf16.mxu0 0
    %91 = vmatpush1.bf16.msra.mxu0 0
    %92 = vmatprep.subr.bf16.mxu0 0
    %93 = vmatpush1.bf16.msra.mxu0 0
    %94 = vmatprep.subr.bf16.mxu0 0
    %95 = vmatpush1.bf16.msra.mxu0 0
    %96 = vmatprep.subr.bf16.mxu0 0
    %97 = vmatpush1.bf16.msra.mxu0 0
    %98 = vmatprep.mubr.bf16.mxu0 0
    %99 = vmatmul.mubr.bf16.gmra.mrb[0].mxu0 %v64
    %v100 = vpop.f32.mrb[0].mxu0
    %v101 = vadd.f32 0.0, %v100
    %v102 = vpop.f32.mrb[0].mxu0
    %v103 = vadd.f32 0.0, %v102
    %v104 = vpop.f32.mrb[0].mxu0
    %v105 = vadd.f32 0.0, %v104
    %v106 = vpop.f32.mrb[0].mxu0
    %v107 = vadd.f32 0.0, %v106
    %108 = vdwg.mxu0
    %109 = vmatprep.subr.bf16.mxu0 0
    %110 = vmatpush1.bf16.msra.mxu0 %v58
    %111 = vmatprep.subr.bf16.mxu0 0
    %112 = vmatpush1.bf16.msra.mxu0 %v61
    %113 = vmatprep.subr.bf16.mxu0 0
    %114 = vmatpush1.bf16.msra.mxu0 0
    %115 = vmatprep.subr.bf16.mxu0 0
    %116 = vmatpush1.bf16.msra.mxu0 0
    %117 = vmatprep.subr.bf16.mxu0 0
    %118 = vmatpush1.bf16.msra.mxu0 0
    %119 = vmatprep.subr.bf16.mxu0 0
    %120 = vmatpush1.bf16.msra.mxu0 0
    %121 = vmatprep.subr.bf16.mxu0 0
    %122 = vmatpush1.bf16.msra.mxu0 0
    %123 = vmatprep.subr.bf16.mxu0 0
    %124 = vmatpush1.bf16.msra.mxu0 0
    %125 = vmatprep.subr.bf16.mxu0 0
    %126 = vmatpush1.bf16.msra.mxu0 0
    %127 = vmatprep.subr.bf16.mxu0 0
    %128 = vmatpush1.bf16.msra.mxu0 0
    %129 = vmatprep.subr.bf16.mxu0 0
    %130 = vmatpush1.bf16.msra.mxu0 0
    %131 = vmatprep.subr.bf16.mxu0 0
    %132 = vmatpush1.bf16.msra.mxu0 0
    %133 = vmatprep.subr.bf16.mxu0 0
    %134 = vmatpush1.bf16.msra.mxu0 0
    %135 = vmatprep.subr.bf16.mxu0 0
    %136 = vmatpush1.bf16.msra.mxu0 0
    %137 = vmatprep.subr.bf16.mxu0 0
    %138 = vmatpush1.bf16.msra.mxu0 0
    %139 = vmatprep.subr.bf16.mxu0 0
    %140 = vmatpush1.bf16.msra.mxu0 0
    %141 = vmatprep.mubr.bf16.mxu0 0
    %142 = vmatmul.mubr.bf16.gmra.mrb[0].mxu0 %v64
    %v143 = vpop.f32.mrb[0].mxu0
    %v144 = vadd.f32 0.0, %v143
    %v145 = vpop.f32.mrb[0].mxu0
    %v146 = vpop.f32.mrb[0].mxu0
    %v147 = vadd.f32 0.0, %v146
    %v148 = vpop.f32.mrb[0].mxu0
    %149 = vdwg.mxu0
    %v150 = vmul.f32 %v103, 0.17677669
    %v151 = vmul.f32 %v107, 0.17677669
    %v152 = vpack.c.bf16 %v150, %v150
    %v153 = vpack.c.bf16 %v151, %v151
    %v154 = vpack.c.bf16 %v101, %v101
    %v155 = vpack.c.bf16 %v105, %v105
    %156 = vmatprep.subr.bf16.mxu0 0
    %157 = vmatpush1.bf16.xpose.msra.mxu0 %v154
    %158 = vmatprep.subr.bf16.mxu0 0
    %159 = vmatpush1.bf16.xpose.msra.mxu0 0
    %160 = vmatprep.subr.bf16.mxu0 0
    %161 = vmatpush1.bf16.xpose.msra.mxu0 0
    %162 = vmatprep.subr.bf16.mxu0 0
    %163 = vmatpush1.bf16.xpose.msra.mxu0 0
    %164 = vmatprep.subr.bf16.mxu0 0
    %165 = vmatpush1.bf16.xpose.msra.mxu0 0
    %166 = vmatprep.subr.bf16.mxu0 0
    %167 = vmatpush1.bf16.xpose.msra.mxu0 0
    %168 = vmatprep.subr.bf16.mxu0 0
    %169 = vmatpush1.bf16.xpose.msra.mxu0 0
    %170 = vmatprep.subr.bf16.mxu0 0
    %171 = vmatpush1.bf16.xpose.msra.mxu0 0
    %172 = vmatprep.subr.bf16.mxu0 0
    %173 = vmatpush1.bf16.xpose.msra.mxu0 0
    %174 = vmatprep.subr.bf16.mxu0 0
    %175 = vmatpush1.bf16.xpose.msra.mxu0 0
    %176 = vmatprep.subr.bf16.mxu0 0
    %177 = vmatpush1.bf16.xpose.msra.mxu0 0
    %178 = vmatprep.subr.bf16.mxu0 0
    %179 = vmatpush1.bf16.xpose.msra.mxu0 0
    %180 = vmatprep.subr.bf16.mxu0 0
    %181 = vmatpush1.bf16.xpose.msra.mxu0 0
    %182 = vmatprep.subr.bf16.mxu0 0
    %183 = vmatpush1.bf16.xpose.msra.mxu0 0
    %184 = vmatprep.subr.bf16.mxu0 0
    %185 = vmatpush1.bf16.xpose.msra.mxu0 0
    %186 = vmatprep.subr.bf16.mxu0 0
    %187 = vmatpush1.bf16.xpose.msra.mxu0 0
    %188 = vmatprep.mubr.bf16.mxu0 0
    %189 = vmatmul.mubr.bf16.gmra.mrb[0].mxu0 %v152
    %v190 = vpop.f32.mrb[0].mxu0
    %v191 = vadd.f32 0.0, %v190
    %v192 = vpop.f32.mrb[0].mxu0
    %v193 = vpop.f32.mrb[0].mxu0
    %v194 = vpop.f32.mrb[0].mxu0
    %195 = vdwg.mxu0
    %196 = vmatprep.subr.bf16.mxu0 0
    %197 = vmatpush1.bf16.xpose.msra.mxu0 %v155
    %198 = vmatprep.subr.bf16.mxu0 0
    %199 = vmatpush1.bf16.xpose.msra.mxu0 0
    %200 = vmatprep.subr.bf16.mxu0 0
    %201 = vmatpush1.bf16.xpose.msra.mxu0 0
    %202 = vmatprep.subr.bf16.mxu0 0
    %203 = vmatpush1.bf16.xpose.msra.mxu0 0
    %204 = vmatprep.subr.bf16.mxu0 0
    %205 = vmatpush1.bf16.xpose.msra.mxu0 0
    %206 = vmatprep.subr.bf16.mxu0 0
    %207 = vmatpush1.bf16.xpose.msra.mxu0 0
    %208 = vmatprep.subr.bf16.mxu0 0
    %209 = vmatpush1.bf16.xpose.msra.mxu0 0
    %210 = vmatprep.subr.bf16.mxu0 0
    %211 = vmatpush1.bf16.xpose.msra.mxu0 0
    %212 = vmatprep.subr.bf16.mxu0 0
    %213 = vmatpush1.bf16.xpose.msra.mxu0 0
    %214 = vmatprep.subr.bf16.mxu0 0
    %215 = vmatpush1.bf16.xpose.msra.mxu0 0
    %216 = vmatprep.subr.bf16.mxu0 0
    %217 = vmatpush1.bf16.xpose.msra.mxu0 0
    %218 = vmatprep.subr.bf16.mxu0 0
    %219 = vmatpush1.bf16.xpose.msra.mxu0 0
    %220 = vmatprep.subr.bf16.mxu0 0
    %221 = vmatpush1.bf16.xpose.msra.mxu0 0
    %222 = vmatprep.subr.bf16.mxu0 0
    %223 = vmatpush1.bf16.xpose.msra.mxu0 0
    %224 = vmatprep.subr.bf16.mxu0 0
    %225 = vmatpush1.bf16.xpose.msra.mxu0 0
    %226 = vmatprep.subr.bf16.mxu0 0
    %227 = vmatpush1.bf16.xpose.msra.mxu0 0
    %228 = vmatprep.mubr.bf16.mxu0 0
    %229 = vmatmul.mubr.bf16.gmra.mrb[0].mxu0 %v153
    %v230 = vpop.f32.mrb[0].mxu0
    %v231 = vadd.f32 0.0, %v230
    %v232 = vpop.f32.mrb[0].mxu0
    %v233 = vpop.f32.mrb[0].mxu0
    %v234 = vpop.f32.mrb[0].mxu0
    %235 = vdwg.mxu0
    %v236 = vlaneseq
    %v237 = vshrl.u32 %v236, 7
    %v238 = vlaneseq
    %v239 = vand.u32 %v238, 127
    %vm240 = vcmp.le.s32.totalorder %v239, %v237
    %v241 = vsel %vm240, %v191, -1e+30
    %v242 = vsel %vm240, %v231, -1e+30
    %vm243 = vcmask 64512
    %v244 = vsel %vm243, %v241, -inf
    %245 = vmax.xlane.f32.xlu0 %v244
    %v246 = vpop.xlane.xlu0 %245
    %v247 = vsel %vm243, %v242, -inf
    %248 = vmax.xlane.f32.xlu0 %v247
    %v249 = vpop.xlane.xlu0 %248
    %v250 = vsub.f32 %v241, %v246
    %v251 = vsub.f32 %v242, %v249
    %v252 = vmul.f32 %v250, 1.442695
    %v253 = vpow.pop %v252
    %v254 = vmul.f32 %v251, 1.442695
    %v255 = vpow.pop %v254
    %v256 = vsel %vm243, %v253, 0.0
    %257 = vadd.xlane.f32.xlu0 %v256
    %v258 = vpop.xlane.xlu0 %257
    %v259 = vsel %vm243, %v255, 0.0
    %260 = vadd.xlane.f32.xlu0 %v259
    %v261 = vpop.xlane.xlu0 %260
    %v262 = vpack.c.bf16 %v253, %v253
    %v263 = vpack.c.bf16 %v255, %v255
    %v264 = vpack.c.bf16 %v144, %v144
    %v265 = vpack.c.bf16 %v147, %v147
    %v267 = vsel %vm243, %v262, 0
    %vm269 = vcmask 1043456
    %v271 = vsel %vm269, %v264, 0
    %273 = vmatprep.subr.bf16.mxu0 0
    %274 = vmatpush1.bf16.msra.mxu0 %v271
    %275 = vmatprep.subr.bf16.mxu0 0
    %276 = vmatpush1.bf16.msra.mxu0 0
    %277 = vmatprep.subr.bf16.mxu0 0
    %278 = vmatpush1.bf16.msra.mxu0 0
    %279 = vmatprep.subr.bf16.mxu0 0
    %280 = vmatpush1.bf16.msra.mxu0 0
    %281 = vmatprep.subr.bf16.mxu0 0
    %282 = vmatpush1.bf16.msra.mxu0 0
    %283 = vmatprep.subr.bf16.mxu0 0
    %284 = vmatpush1.bf16.msra.mxu0 0
    %285 = vmatprep.subr.bf16.mxu0 0
    %286 = vmatpush1.bf16.msra.mxu0 0
    %287 = vmatprep.subr.bf16.mxu0 0
    %288 = vmatpush1.bf16.msra.mxu0 0
    %289 = vmatprep.subr.bf16.mxu0 0
    %290 = vmatpush1.bf16.msra.mxu0 0
    %291 = vmatprep.subr.bf16.mxu0 0
    %292 = vmatpush1.bf16.msra.mxu0 0
    %293 = vmatprep.subr.bf16.mxu0 0
    %294 = vmatpush1.bf16.msra.mxu0 0
    %295 = vmatprep.subr.bf16.mxu0 0
    %296 = vmatpush1.bf16.msra.mxu0 0
    %297 = vmatprep.subr.bf16.mxu0 0
    %298 = vmatpush1.bf16.msra.mxu0 0
    %299 = vmatprep.subr.bf16.mxu0 0
    %300 = vmatpush1.bf16.msra.mxu0 0
    %301 = vmatprep.subr.bf16.mxu0 0
    %302 = vmatpush1.bf16.msra.mxu0 0
    %303 = vmatprep.subr.bf16.mxu0 0
    %304 = vmatpush1.bf16.msra.mxu0 0
    %305 = vmatprep.mubr.bf16.mxu0 0
    %306 = vmatmul.mubr.bf16.gmra.mrb[0].mxu0 %v267
    %v307 = vpop.f32.mrb[0].mxu0
    %v308 = vadd.f32 0.0, %v307
    %v309 = vpop.f32.mrb[0].mxu0
    %v310 = vpop.f32.mrb[0].mxu0
    %v311 = vpop.f32.mrb[0].mxu0
    %312 = vdwg.mxu0
    %v314 = vsel %vm243, %v263, 0
    %v317 = vsel %vm269, %v265, 0
    %319 = vmatprep.subr.bf16.mxu0 0
    %320 = vmatpush1.bf16.msra.mxu0 %v317
    %321 = vmatprep.subr.bf16.mxu0 0
    %322 = vmatpush1.bf16.msra.mxu0 0
    %323 = vmatprep.subr.bf16.mxu0 0
    %324 = vmatpush1.bf16.msra.mxu0 0
    %325 = vmatprep.subr.bf16.mxu0 0
    %326 = vmatpush1.bf16.msra.mxu0 0
    %327 = vmatprep.subr.bf16.mxu0 0
    %328 = vmatpush1.bf16.msra.mxu0 0
    %329 = vmatprep.subr.bf16.mxu0 0
    %330 = vmatpush1.bf16.msra.mxu0 0
    %331 = vmatprep.subr.bf16.mxu0 0
    %332 = vmatpush1.bf16.msra.mxu0 0
    %333 = vmatprep.subr.bf16.mxu0 0
    %334 = vmatpush1.bf16.msra.mxu0 0
    %335 = vmatprep.subr.bf16.mxu0 0
    %336 = vmatpush1.bf16.msra.mxu0 0
    %337 = vmatprep.subr.bf16.mxu0 0
    %338 = vmatpush1.bf16.msra.mxu0 0
    %339 = vmatprep.subr.bf16.mxu0 0
    %340 = vmatpush1.bf16.msra.mxu0 0
    %341 = vmatprep.subr.bf16.mxu0 0
    %342 = vmatpush1.bf16.msra.mxu0 0
    %343 = vmatprep.subr.bf16.mxu0 0
    %344 = vmatpush1.bf16.msra.mxu0 0
    %345 = vmatprep.subr.bf16.mxu0 0
    %346 = vmatpush1.bf16.msra.mxu0 0
    %347 = vmatprep.subr.bf16.mxu0 0
    %348 = vmatpush1.bf16.msra.mxu0 0
    %349 = vmatprep.subr.bf16.mxu0 0
    %350 = vmatpush1.bf16.msra.mxu0 0
    %351 = vmatprep.mubr.bf16.mxu0 0
    %352 = vmatmul.mubr.bf16.gmra.mrb[0].mxu0 %v314
    %v353 = vpop.f32.mrb[0].mxu0
    %v354 = vadd.f32 0.0, %v353
    %v355 = vpop.f32.mrb[0].mxu0
    %v356 = vpop.f32.mrb[0].mxu0
    %v357 = vpop.f32.mrb[0].mxu0
    %358 = vdwg.mxu0
    %v359 = vrcp.pop %v258
    %v360 = vrcp.pop %v261
    %v361 = vmul.f32 %v308, %v359
    %v362 = vmul.f32 %v354, %v360
    %vm363 = vcmask 130048
    %364 = vst.msk [vmem:[#allocation7] sm:$0xff] %vm363, %v361
    %365 = vst.msk [vmem:[#allocation7 + $0x8] sm:$0xff] %vm363, %v362
    // Predicated region
    $region18: #{tpu_custom_call.1} parent=1 // pred_check
      _
    $region19: #{tpu_custom_call.1} parent=1 // pred_check_branch
      %367 = sbr.rel (0) target = $region21
    $region20: #{tpu_custom_call.1} parent=1 // pred_region
      %s369 = ssub.s32 256, 256
      %370 = vsyncadd [#allocation4], %s369
      %s371 = sshll.u32 [#allocation7], 4
      %s372 = int_to_ptr.vmem [resolvable:$true] %s371
      %377 = dma.vmem_to_hbm [thread:$0]  %s372, 256, %s2, [#allocation4], 128, 128, 8
    $region21: #{tpu_custom_call.1} parent=1 // pred_fallthru
      _
    // Predicated region
    $region22: #{tpu_custom_call.1} parent=1 // pred_check
      _
    $region23: #{tpu_custom_call.1} parent=1 // pred_check_branch
      %379 = sbr.rel (0) target = $region25
    $region24: #{tpu_custom_call.1} parent=1 // pred_region
      %380 = dma.done [#allocation4], 256
    $region25: #{tpu_custom_call.1} parent=1 // pred_fallthru
      _
    %381 = vsyncpa [#allocation3], 1
    %382 = vsyncpa [#allocation6], 1
    %383 = vsyncpa [#allocation4], 1

</llo_original>
